<compile_context>
chip_gen: v7x
topology: tpu7x:2x2x1
jax: 0.10.0
libtpu: 0.0.40
codegen_flags: <defaults>
</compile_context>

<pallas_src>
import functools

import jax
import jax.numpy as jnp
from jax import lax
from jax.experimental import pallas as pl
from jax.experimental.pallas import tpu as pltpu

BN_EPS = 1e-5


def _round_up(x, m):
    return pl.cdiv(x, m) * m


def _vmem_budget_bytes():
    """Generation-aware scoped-VMEM budget: ~48 MiB on v7x, ~96 MiB on v5e/v6e."""
    cap = 128 << 20
    try:
        cap = int(getattr(pltpu.get_tpu_info(), "vmem_capacity_bytes", cap))
    except Exception:
        pass
    return int(min(max(cap * 3 // 4, 32 << 20), 100 << 20))


def _derive_s_tile(K, OC, S, vmem_budget):
    """Largest 128-multiple spatial tile whose double-buffered streams fit the budget."""
    # Per lane-column bytes: pass 1 streams bf16 (K patches + OC conv out), pass 2
    # streams bf16 OC in + f32 OC out; each stream is double-buffered.
    bytes_per_col = 2 * (2 * K + 2 * OC) + 2 * (2 * OC + 4 * OC)
    tile = (vmem_budget // 2) // max(bytes_per_col, 1)   # half the budget for streams
    tile = max(128, (tile // 128) * 128)
    tile = min(tile, 8192)                               # amortizes ~0.35 us/step overhead
    return int(min(tile, _round_up(S, 128)))


def _conv_stats_kernel(xT_ref, w_ref, conv_ref, part_ref):
    """Pass 1: lane-dense conv tile + per-batch-element stat accumulation.

    xT_ref:   (1, K, TILE_S)  bf16  im2col patches for one batch element
    w_ref:    (OC, K)         bf16  conv weight, K = C*KH*KW
    conv_ref: (1, OC, TILE_S) bf16  conv output tile (lane-dense)
    part_ref: (1, OC, 2)      f32   per-batch [sum, sum_sq], revisited across S tiles
    """
    s = pl.program_id(1)

    @pl.when(s == 0)
    def _():
        part_ref[...] = jnp.zeros_like(part_ref)

    # (OC, K) @ (K, TILE_S) on the MXU; f32 accumulation; lane-dense result.
    conv = jnp.dot(w_ref[...], xT_ref[0], preferred_element_type=jnp.float32)
    conv_ref[0] = conv.astype(jnp.bfloat16)   # bf16 intermediate (halves the stream)

    # Single-pass stats accumulated on the pre-cast f32 value (lane reduction -> XLU).
    part_ref[0, :, 0:1] += jnp.sum(conv, axis=1, keepdims=True)
    part_ref[0, :, 1:2] += jnp.sum(conv * conv, axis=1, keepdims=True)


def _bn_relu_kernel(conv_ref, ss_ref, o_ref):
    """Pass 2: y = relu(conv * scale + shift) on a lane-dense (OC, TILE_S) tile."""
    ss = ss_ref[...]
    conv = conv_ref[0].astype(jnp.float32)
    o_ref[0] = jnp.maximum(conv * ss[:, 0:1] + ss[:, 1:2], 0.0)


def encoder_forward(x, weight, bias, gamma, beta, *, stride, pad):
    """EncoderModule.forward(x): x NCHW, weight OIHW (PyTorch layouts)."""
    del bias  # exactly cancelled by training-mode BatchNorm (see header note)

    N, C, H, W = x.shape
    OC, _, KH, KW = weight.shape
    OH = (H + 2 * pad - KH) // stride + 1
    OW = (W + 2 * pad - KW) // stride + 1
    S = OH * OW
    K = C * KH * KW
    M = N * S

    # --- glue: im2col patches, per batch element, lane-dense (N, K, S), in bf16 ---
    # TODO(synk): move this into the conv kernel (see header).
    xp = jnp.pad(x, ((0, 0), (0, 0), (pad, pad), (pad, pad)))
    cols = [
        xp[:, :, kh:kh + stride * OH:stride, kw:kw + stride * OW:stride]
        for kh in range(KH) for kw in range(KW)
    ]                                                    # each (N, C, OH, OW)
    patches = (jnp.stack(cols, axis=2)                   # (N, C, KH*KW, OH, OW)
               .reshape(N, K, S)                         # K is C-major, (kh,kw)-minor
               .astype(jnp.bfloat16))
    w2d = weight.reshape(OC, K).astype(jnp.bfloat16)     # same K ordering

    # --- generation-aware tile + scoped-VMEM budget; pad S with zero columns.
    # Zero patch columns contribute exactly 0 to the (bias-free) conv and to the
    # stats (divided by the true M), and the padded outputs are sliced off below. ---
    vmem_limit = _vmem_budget_bytes()
    tile = _derive_s_tile(K, OC, S, vmem_limit)
    s_pad = _round_up(S, tile)
    if s_pad != S:
        patches = jnp.pad(patches, ((0, 0), (0, 0), (0, s_pad - S)))
    num_s = s_pad // tile

    params_p1 = pltpu.CompilerParams(
        dimension_semantics=("parallel", "arbitrary"), vmem_limit_bytes=vmem_limit)
    params_p2 = pltpu.CompilerParams(
        dimension_semantics=("parallel", "parallel"), vmem_limit_bytes=vmem_limit)

    # Pass 1: lane-dense bf16 conv tiles + per-batch partial batch statistics.
    conv_bf16, partials = pl.pallas_call(
        _conv_stats_kernel,
        out_shape=(jax.ShapeDtypeStruct((N, OC, s_pad), jnp.bfloat16),
                   jax.ShapeDtypeStruct((N, OC, 2), jnp.float32)),
        grid=(N, num_s),
        in_specs=[
            pl.BlockSpec((1, K, tile), lambda n, s: (n, 0, s)),
            pl.BlockSpec((OC, K), lambda n, s: (0, 0)),
        ],
        out_specs=(
            pl.BlockSpec((1, OC, tile), lambda n, s: (n, 0, s)),
            pl.BlockSpec((1, OC, 2), lambda n, s: (n, 0, 0)),
        ),
        compiler_params=params_p1,
    )(patches, w2d)

    # Tiny wrapper epilogue (a few hundred bytes of XLA work): fold the per-batch
    # partial sums with gamma/beta into packed training-mode BN (scale, shift).
    sums = jnp.sum(partials, axis=0)                     # (OC, 2)
    mean = sums[:, 0] / M
    var = jnp.maximum(sums[:, 1] / M - mean * mean, 0.0)  # single-pass var (clamped)
    rstd = lax.rsqrt(var + BN_EPS)
    scale = gamma.astype(jnp.float32) * rstd
    shift = beta.astype(jnp.float32) - mean * scale
    scale_shift = jnp.stack([scale, shift], axis=1)      # (OC, 2)

    # Pass 2: y = relu(conv * scale + shift), fully parallel over (N, S tiles).
    out = pl.pallas_call(
        _bn_relu_kernel,
        out_shape=jax.ShapeDtypeStruct((N, OC, s_pad), jnp.float32),
        grid=(N, num_s),
        in_specs=[
            pl.BlockSpec((1, OC, tile), lambda n, s: (n, 0, s)),
            pl.BlockSpec((OC, 2), lambda n, s: (0, 0)),
        ],
        out_specs=pl.BlockSpec((1, OC, tile), lambda n, s: (n, 0, s)),
        compiler_params=params_p2,
    )(conv_bf16, scale_shift)

    # Free layout restore: (N, OC, S) is already NCHW-contiguous — no transpose.
    if s_pad != S:
        out = out[:, :, :S]
    return out.reshape(N, OC, OH, OW)


def _reference_forward(x, weight, bias, gamma, beta, *, stride, pad):
    """Plain-JAX f32 reference reproducing the PyTorch forward (training-mode BN)."""
    conv = lax.conv_general_dilated(
        x, weight,
        window_strides=(stride, stride),
        padding=((pad, pad), (pad, pad)),
        dimension_numbers=("NCHW", "OIHW", "NCHW"),
    ) + bias.reshape(1, -1, 1, 1)
    mean = jnp.mean(conv, axis=(0, 2, 3), keepdims=True)
    var = jnp.mean(jnp.square(conv - mean), axis=(0, 2, 3), keepdims=True)
    xhat = (conv - mean) * lax.rsqrt(var + BN_EPS)
    y = xhat * gamma.reshape(1, -1, 1, 1) + beta.reshape(1, -1, 1, 1)
    return jnp.maximum(y, 0.0)


if __name__ == "__main__":
    # EncoderModule(input_channels=4, output_channels=8, stride=1, kernel=3, pad=1)
    # applied to x of shape (2, 4, 16, 16).
    N, C, H, W = 2, 4, 16, 16
    OC, KH, KW = 8, 3, 3
    stride, pad = 1, 1

    key = jax.random.PRNGKey(0)
    kx, kw, kb = jax.random.split(key, 3)
    x = jax.random.normal(kx, (N, C, H, W), dtype=jnp.float32)
    weight = 0.1 * jax.random.normal(kw, (OC, C, KH, KW), dtype=jnp.float32)
    bias = 0.1 * jax.random.normal(kb, (OC,), dtype=jnp.float32)
    gamma = jnp.ones((OC,), dtype=jnp.float32)   # BatchNorm2d default init
    beta = jnp.zeros((OC,), dtype=jnp.float32)

    fwd = jax.jit(functools.partial(encoder_forward, stride=stride, pad=pad))
    out = fwd(x, weight, bias, gamma, beta)
    out = jax.block_until_ready(out)

    ref = _reference_forward(x, weight, bias, gamma, beta, stride=stride, pad=pad)
    assert out.shape == (N, OC, H, W), out.shape
    max_err = float(jnp.max(jnp.abs(out - ref)))
    # bf16 MXU operands + bf16 conv intermediate (f32 accumulation/stats) -> loosened
    # tolerance versus the f32 reference.
    assert jnp.allclose(out, ref, atol=5e-2, rtol=5e-2), max_err

    print("KERNEL_OK")
</pallas_src>

<mosaic_0001>
module attributes {stable_mosaic.version = 11 : i64} {
  func.func @_conv_stats_kernel(%arg0: i32, %arg1: i32, %arg2: memref<1x36x256xbf16, #tpu.memory_space<vmem>>, %arg3: memref<8x36xbf16, #tpu.memory_space<vmem>>, %arg4: memref<1x8x256xbf16, #tpu.memory_space<vmem>>, %arg5: memref<1x8x2xf32, #tpu.memory_space<vmem>>) attributes {dimension_semantics = [#tpu.dimension_semantics<parallel>, #tpu.dimension_semantics<arbitrary>], iteration_bounds = array<i64: 2, 1>, scalar_prefetch = 0 : i64, scratch_operands = 0 : i64, tpu.core_type = #tpu.core_type<tc>, window_params = [{transform_indices = @transform_0, window_bounds = array<i64: 1, 36, 256>}, {pipeline_mode = #tpu.pipeline_mode<synchronous>, transform_indices = @transform_1, window_bounds = array<i64: 8, 36>}, {transform_indices = @transform_2, window_bounds = array<i64: 1, 8, 256>}, {transform_indices = @transform_3, window_bounds = array<i64: 1, 8, 2>}]} {
    %c0_i32 = arith.constant 0 : i32
    %0 = arith.cmpi eq, %arg1, %c0_i32 : i32
    %1 = arith.extui %0 : i1 to i32
    %c0_i32_0 = arith.constant 0 : i32
    %2 = arith.cmpi ne, %1, %c0_i32_0 : i32
    scf.if %2 {
      %cst_21 = arith.constant 0.000000e+00 : f32
      %28 = vector.broadcast %cst_21 : f32 to vector<1x8x2xf32>
      %c0_22 = arith.constant 0 : index
      %c0_23 = arith.constant 0 : index
      %c0_24 = arith.constant 0 : index
      %29 = vector.load %arg5[%c0_22, %c0_23, %c0_24] : memref<1x8x2xf32, #tpu.memory_space<vmem>>, vector<1x8x2xf32>
      tpu.vector_store %arg5[%c0_22, %c0_23, %c0_24], %28 {strides = array<i32>} : memref<1x8x2xf32, #tpu.memory_space<vmem>>, vector<1x8x2xf32>,
    } else {
    }
    %c0 = arith.constant 0 : index
    %c0_1 = arith.constant 0 : index
    %3 = vector.load %arg3[%c0, %c0_1] : memref<8x36xbf16, #tpu.memory_space<vmem>>, vector<8x36xbf16>
    %c0_2 = arith.constant 0 : index
    %c0_3 = arith.constant 0 : index
    %c0_4 = arith.constant 0 : index
    %4 = vector.load %arg2[%c0_2, %c0_3, %c0_4] : memref<1x36x256xbf16, #tpu.memory_space<vmem>>, vector<1x36x256xbf16>
    %5 = vector.shape_cast %4 : vector<1x36x256xbf16> to vector<36x256xbf16>
    %cst = arith.constant dense<0.000000e+00> : vector<8x256xf32>
    %6 = tpu.matmul %3, %5, %cst {dimension_numbers = #tpu.dot_dimension_numbers<[1], [0], [0], [1], [0, 0, 1, 1], [], []>} : vector<8x36xbf16>, vector<36x256xbf16>, vector<8x256xf32> -> vector<8x256xf32>
    %7 = arith.truncf %6 : vector<8x256xf32> to vector<8x256xbf16>
    %c0_5 = arith.constant 0 : index
    %c0_6 = arith.constant 0 : index
    %c0_7 = arith.constant 0 : index
    %8 = vector.load %arg4[%c0_5, %c0_6, %c0_7] : memref<1x8x256xbf16, #tpu.memory_space<vmem>>, vector<1x8x256xbf16>
    %9 = vector.shape_cast %8 : vector<1x8x256xbf16> to vector<8x256xbf16>
    %10 = vector.shape_cast %7 : vector<8x256xbf16> to vector<1x8x256xbf16>
    tpu.vector_store %arg4[%c0_5, %c0_6, %c0_7], %10 {strides = array<i32>} : memref<1x8x256xbf16, #tpu.memory_space<vmem>>, vector<1x8x256xbf16>,
    %c0_8 = arith.constant 0 : index
    %c0_9 = arith.constant 0 : index
    %c0_10 = arith.constant 0 : index
    %11 = vector.load %arg5[%c0_8, %c0_9, %c0_10] : memref<1x8x2xf32, #tpu.memory_space<vmem>>, vector<1x8x1xf32>
    %12 = vector.shape_cast %11 : vector<1x8x1xf32> to vector<8x1xf32>
    %cst_11 = arith.constant dense<0.000000e+00> : vector<8xf32>
    %13 = vector.multi_reduction <add>, %6, %cst_11 [1] : vector<8x256xf32> to vector<8xf32>
    %14 = vector.shape_cast %13 : vector<8xf32> to vector<8x1xf32>
    %15 = arith.addf %12, %14 : vector<8x1xf32>
    %c0_12 = arith.constant 0 : index
    %c0_13 = arith.constant 0 : index
    %c0_14 = arith.constant 0 : index
    %16 = vector.load %arg5[%c0_12, %c0_13, %c0_14] : memref<1x8x2xf32, #tpu.memory_space<vmem>>, vector<1x8x1xf32>
    %17 = vector.shape_cast %16 : vector<1x8x1xf32> to vector<8x1xf32>
    %18 = vector.shape_cast %15 : vector<8x1xf32> to vector<1x8x1xf32>
    tpu.vector_store %arg5[%c0_12, %c0_13, %c0_14], %18 {strides = array<i32>} : memref<1x8x2xf32, #tpu.memory_space<vmem>>, vector<1x8x1xf32>,
    %c0_15 = arith.constant 0 : index
    %c0_16 = arith.constant 0 : index
    %c1 = arith.constant 1 : index
    %19 = vector.load %arg5[%c0_15, %c0_16, %c1] : memref<1x8x2xf32, #tpu.memory_space<vmem>>, vector<1x8x1xf32>
    %20 = vector.shape_cast %19 : vector<1x8x1xf32> to vector<8x1xf32>
    %21 = arith.mulf %6, %6 : vector<8x256xf32>
    %cst_17 = arith.constant dense<0.000000e+00> : vector<8xf32>
    %22 = vector.multi_reduction <add>, %21, %cst_17 [1] : vector<8x256xf32> to vector<8xf32>
    %23 = vector.shape_cast %22 : vector<8xf32> to vector<8x1xf32>
    %24 = arith.addf %20, %23 : vector<8x1xf32>
    %c0_18 = arith.constant 0 : index
    %c0_19 = arith.constant 0 : index
    %c1_20 = arith.constant 1 : index
    %25 = vector.load %arg5[%c0_18, %c0_19, %c1_20] : memref<1x8x2xf32, #tpu.memory_space<vmem>>, vector<1x8x1xf32>
    %26 = vector.shape_cast %25 : vector<1x8x1xf32> to vector<8x1xf32>
    %27 = vector.shape_cast %24 : vector<8x1xf32> to vector<1x8x1xf32>
    tpu.vector_store %arg5[%c0_18, %c0_19, %c1_20], %27 {strides = array<i32>} : memref<1x8x2xf32, #tpu.memory_space<vmem>>, vector<1x8x1xf32>,
    return
  }
  func.func @transform_0(%arg0: i32, %arg1: i32) -> (i32, i32, i32) {
    %c0_i32 = arith.constant 0 : i32
    %c0_i32_0 = arith.constant 0 : i32
    return %arg0, %c0_i32, %arg1 : i32, i32, i32
  }
  func.func @transform_1(%arg0: i32, %arg1: i32) -> (i32, i32) {
    %c0_i32 = arith.constant 0 : i32
    %c0_i32_0 = arith.constant 0 : i32
    %c0_i32_1 = arith.constant 0 : i32
    return %c0_i32, %c0_i32_0 : i32, i32
  }
  func.func @transform_2(%arg0: i32, %arg1: i32) -> (i32, i32, i32) {
    %c0_i32 = arith.constant 0 : i32
    %c0_i32_0 = arith.constant 0 : i32
    return %arg0, %c0_i32, %arg1 : i32, i32, i32
  }
  func.func @transform_3(%arg0: i32, %arg1: i32) -> (i32, i32, i32) {
    %c0_i32 = arith.constant 0 : i32
    %c0_i32_0 = arith.constant 0 : i32
    %c0_i32_1 = arith.constant 0 : i32
    return %arg0, %c0_i32, %c0_i32_0 : i32, i32, i32
  }
}

module attributes {stable_mosaic.version = 11 : i64} {
  func.func @_bn_relu_kernel(%arg0: i32, %arg1: i32, %arg2: memref<1x8x256xbf16, #tpu.memory_space<vmem>>, %arg3: memref<8x2xf32, #tpu.memory_space<vmem>>, %arg4: memref<1x8x256xf32, #tpu.memory_space<vmem>>) attributes {dimension_semantics = [#tpu.dimension_semantics<parallel>, #tpu.dimension_semantics<parallel>], iteration_bounds = array<i64: 2, 1>, scalar_prefetch = 0 : i64, scratch_operands = 0 : i64, tpu.core_type = #tpu.core_type<tc>, window_params = [{transform_indices = @transform_0, window_bounds = array<i64: 1, 8, 256>}, {pipeline_mode = #tpu.pipeline_mode<synchronous>, transform_indices = @transform_1, window_bounds = array<i64: 8, 2>}, {transform_indices = @transform_2, window_bounds = array<i64: 1, 8, 256>}]} {
    %c0 = arith.constant 0 : index
    %c0_0 = arith.constant 0 : index
    %0 = vector.load %arg3[%c0, %c0_0] : memref<8x2xf32, #tpu.memory_space<vmem>>, vector<8x2xf32>
    %c0_1 = arith.constant 0 : index
    %c0_2 = arith.constant 0 : index
    %c0_3 = arith.constant 0 : index
    %1 = vector.load %arg2[%c0_1, %c0_2, %c0_3] : memref<1x8x256xbf16, #tpu.memory_space<vmem>>, vector<1x8x256xbf16>
    %2 = vector.shape_cast %1 : vector<1x8x256xbf16> to vector<8x256xbf16>
    %3 = arith.extf %2 : vector<8x256xbf16> to vector<8x256xf32>
    %4 = vector.extract_strided_slice %0 {offsets = [0, 0], sizes = [8, 1], strides = [1, 1]} : vector<8x2xf32> to vector<8x1xf32>
    %5 = vector.broadcast %4 : vector<8x1xf32> to vector<8x256xf32>
    %6 = arith.mulf %3, %5 : vector<8x256xf32>
    %7 = vector.extract_strided_slice %0 {offsets = [0, 1], sizes = [8, 1], strides = [1, 1]} : vector<8x2xf32> to vector<8x1xf32>
    %8 = vector.broadcast %7 : vector<8x1xf32> to vector<8x256xf32>
    %9 = arith.addf %6, %8 : vector<8x256xf32>
    %cst = arith.constant 0.000000e+00 : f32
    %10 = vector.broadcast %cst : f32 to vector<8x256xf32>
    %11 = arith.maximumf %9, %10 : vector<8x256xf32>
    %c0_4 = arith.constant 0 : index
    %c0_5 = arith.constant 0 : index
    %c0_6 = arith.constant 0 : index
    %12 = vector.load %arg4[%c0_4, %c0_5, %c0_6] : memref<1x8x256xf32, #tpu.memory_space<vmem>>, vector<1x8x256xf32>
    %13 = vector.shape_cast %12 : vector<1x8x256xf32> to vector<8x256xf32>
    %14 = vector.shape_cast %11 : vector<8x256xf32> to vector<1x8x256xf32>
    tpu.vector_store %arg4[%c0_4, %c0_5, %c0_6], %14 {strides = array<i32>} : memref<1x8x256xf32, #tpu.memory_space<vmem>>, vector<1x8x256xf32>,
    return
  }
  func.func @transform_0(%arg0: i32, %arg1: i32) -> (i32, i32, i32) {
    %c0_i32 = arith.constant 0 : i32
    %c0_i32_0 = arith.constant 0 : i32
    return %arg0, %c0_i32, %arg1 : i32, i32, i32
  }
  func.func @transform_1(%arg0: i32, %arg1: i32) -> (i32, i32) {
    %c0_i32 = arith.constant 0 : i32
    %c0_i32_0 = arith.constant 0 : i32
    %c0_i32_1 = arith.constant 0 : i32
    return %c0_i32, %c0_i32_0 : i32, i32
  }
  func.func @transform_2(%arg0: i32, %arg1: i32) -> (i32, i32, i32) {
    %c0_i32 = arith.constant 0 : i32
    %c0_i32_0 = arith.constant 0 : i32
    return %arg0, %c0_i32, %arg1 : i32, i32, i32
  }
}

</mosaic_0001>

<llo_original>
// kernel: encoder_forward.3
$region0: #{encoder_forward.3}
  #allocation0 [shape = 'u32[]', space=smem, size = 0x4, offset = 0x4, fixed_abs, tag = 'smem constant byte address 0x4 - core index']
  #allocation1 [shape = 'u32[144,128]{1,0:T(1,128)}', space=vmem, size = 0x12000, scoped, tag = 'internal scratch']
  %s0 = inlined_call_operand.hbm [shape: bf16[2,8,256], index: 0, kind: input, shape index: {}]
  %s1 = inlined_call_operand.hbm [shape: f32[8,2], index: 1, kind: input, shape index: {}]
  %s2 = inlined_call_operand.hbm [shape: f32[2,8,256], index: 2, kind: output, shape index: {}]
  %s3 = sld [smem:[#allocation0]]
  $region49: #{encoder_forward.3} parent=0
    _
  %s5 = ssub.s32 1, %s3
  %s6 = scalar_select 0, %s5, %s3
  $region1: #{encoder_forward.3} parent=0
    #allocation2 [shape = 'u8[8192]{0}', space=vmem, size = 0x2000, scoped, tag = 'input window, operand 0']
    #allocation3 [shape = 's32[2]{0}', space=sflag, size = 0x8, scoped, tag = 'scoped memory for encoder_forward.3']
    #allocation4 [shape = 's32[2]{0}', space=sflag, size = 0x8, scoped, tag = 'scoped memory for encoder_forward.3']
    #allocation5 [shape = 'u8[4096]{0}', space=vmem, size = 0x1000, scoped, tag = 'input window, operand 1, single buffered']
    #allocation6 [shape = 's32[1]{0}', space=sflag, size = 0x4, scoped, tag = 'scoped memory for encoder_forward.3']
    #allocation7 [shape = 'u8[16384]{0}', space=vmem, size = 0x4000, scoped, tag = 'output window, operand 0']
    %7 = vsyncpa [#allocation3], 0
    %s8 = scalar_lea.sflag [#allocation3], 1
    %9 = vsyncpa %s8, 0
    %10 = vsyncpa [#allocation6], 0
    %11 = vsyncpa [#allocation4], 0
    %s12 = scalar_lea.sflag [#allocation4], 1
    %13 = vsyncpa %s12, 0
    loop: start=0, step=1, limit=4
    $region2: #{encoder_forward.3} parent=1 // loop_pre_header
      _
    $region3: #{encoder_forward.3} parent=1 // loop_header
      %s15 = sphi 0, %s19
      %p16 = scmp.ge.s32.totalorder %s15, 4
      %s22 = sphi 0, %s34
      %s23 = sphi 0, %s30
      %s24 = sphi 0, %s22
      %s25 = sphi 0, %s23
      %s26 = sphi 0, %s24
      %s27 = sphi 0, %s25
      %s39 = sphi 0, %s41
      %s42 = sphi 0, %s39
      %s43 = sphi 0, %s42
      %s59 = sphi 0, %s43
      %s63 = sphi 0, %s63
      %s65 = sphi 0, %s63
      %s66 = sphi 0, %s65
      %s80 = sphi 0, %s66
      %s88 = sphi 0, %s90
      %s91 = sphi 0, %s88
      %s92 = sphi 0, %s91
      %s108 = sphi 0, %s92
    $region4: #{encoder_forward.3} parent=1 // loop_header_branch
      %18 = sbr.rel (%p16) target = $region8
    $region5: #{encoder_forward.3} parent=1 // loop_body
      %s20 = ssub.s32 %s15, 1
      %s21 = ssub.s32 %s15, 2
      %s28 = sadd.s32 1, %s23
      %p29 = scmp.ge.s32.totalorder %s28, 1
      %s30 = scalar_select %p29, 0, %s28
      %s31 = sadd.s32 1, %s22
      %s32 = scalar_select %p29, %s31, %s22
      %p33 = scmp.ge.s32.totalorder %s32, 2
      %s34 = scalar_select %p33, 0, %s32
      %s35 = ssub.s32 %s22, %s34
      %s36 = ssub.s32 %s23, %s30
      %s37 = sor.u32 %s35, %s36
      %p38 = scmp.eq.s32.totalorder %s37, 0
      %s40 = sadd.s32 %s39, 1
      %s41 = scalar_select %p38, %s39, %s40
      %p44 = pneg %p38
      %p45 = scmp.eq.s32.totalorder %s15, 1
      %p46 = por %p44, %p45
      %p47 = scmp.ne.s32.totalorder %s39, %s42
      %p48 = scmp.eq.s32.totalorder %s15, 0
      %p49 = por %p47, %p48
      %p50 = scmp.ne.s32.totalorder %s39, %s42
      %p51 = scmp.eq.s32.totalorder %s20, 1
      %p52 = por %p50, %p51
      %p53 = scmp.ne.s32.totalorder %s42, %s43
      %p54 = scmp.eq.s32.totalorder %s20, 0
      %p55 = por %p53, %p54
      %p56 = scmp.ne.s32.totalorder %s42, %s43
      %p57 = scmp.eq.s32.totalorder %s21, 1
      %p58 = por %p56, %p57
      %p60 = scmp.ne.s32.totalorder %s43, %s59
      %p61 = scmp.eq.s32.totalorder %s21, 0
      %p62 = por %p60, %p61
      %s64 = sadd.s32 %s63, 1
      %p67 = scmp.eq.s32.totalorder %s15, 1
      %p68 = scmp.ne.s32.totalorder %s63, %s65
      %p69 = scmp.eq.s32.totalorder %s15, 0
      %p70 = por %p68, %p69
      %p71 = scmp.ne.s32.totalorder %s63, %s65
      %p72 = scmp.eq.s32.totalorder %s20, 1
      %p73 = por %p71, %p72
      %p74 = scmp.ne.s32.totalorder %s65, %s66
      %p75 = scmp.eq.s32.totalorder %s20, 0
      %p76 = por %p74, %p75
      %p77 = scmp.ne.s32.totalorder %s65, %s66
      %p78 = scmp.eq.s32.totalorder %s21, 1
      %p79 = por %p77, %p78
      %p81 = scmp.ne.s32.totalorder %s66, %s80
      %p82 = scmp.eq.s32.totalorder %s21, 0
      %p83 = por %p81, %p82
      %s84 = ssub.s32 %s22, %s34
      %s85 = ssub.s32 %s23, %s30
      %s86 = sor.u32 %s84, %s85
      %p87 = scmp.eq.s32.totalorder %s86, 0
      %s89 = sadd.s32 %s88, 1
      %s90 = scalar_select %p87, %s88, %s89
      %p93 = pneg %p87
      %p94 = scmp.eq.s32.totalorder %s15, 1
      %p95 = por %p93, %p94
      %p96 = scmp.ne.s32.totalorder %s88, %s91
      %p97 = scmp.eq.s32.totalorder %s15, 0
      %p98 = por %p96, %p97
      %p99 = scmp.ne.s32.totalorder %s88, %s91
      %p100 = scmp.eq.s32.totalorder %s20, 1
      %p101 = por %p99, %p100
      %p102 = scmp.ne.s32.totalorder %s91, %s92
      %p103 = scmp.eq.s32.totalorder %s20, 0
      %p104 = por %p102, %p103
      %p105 = scmp.ne.s32.totalorder %s91, %s92
      %p106 = scmp.eq.s32.totalorder %s21, 1
      %p107 = por %p105, %p106
      %p109 = scmp.ne.s32.totalorder %s92, %s108
      %p110 = scmp.eq.s32.totalorder %s21, 0
      %p111 = por %p109, %p110
      %p112 = scmp.le.s32.totalorder 1, %s15
      %p113 = scmp.lt.s32.totalorder %s15, 3
      %p114 = pnand %p112, %p113
      %p115 = pneg %p114
      // Predicated region
      $region9: #{encoder_forward.3} parent=5 // pred_check
        _
      $region10: #{encoder_forward.3} parent=5 // pred_check_branch
        %117 = sbr.rel (%p114) target = $region12
      $region11: #{encoder_forward.3} parent=5 // pred_region
        %s118 = ssub.s32 %s15, 1
        // Predicated region
        $region13: #{encoder_forward.3} parent=11 // pred_check
          %p119 = pneg %p76
        $region14: #{encoder_forward.3} parent=11 // pred_check_branch
          %121 = sbr.rel (%p119) target = $region16
        $region15: #{encoder_forward.3} parent=11 // pred_region
          %s123 = ssub.s32 128, 128
          %124 = vsyncadd [#allocation6], %s123
          %s126 = sshll.u32 [#allocation5], 4
          %s127 = int_to_ptr.vmem [resolvable:$true] %s126
          %129 = dma.hbm_to_vmem [thread:$0]  %s1, 128, %s127, [#allocation6]
        $region16: #{encoder_forward.3} parent=11 // pred_fallthru
          _
      $region12: #{encoder_forward.3} parent=5 // pred_fallthru
        _
      %p130 = scmp.lt.s32.totalorder %s15, 2
      // Predicated region
      $region17: #{encoder_forward.3} parent=5 // pred_check
        %p131 = pneg %p130
      $region18: #{encoder_forward.3} parent=5 // pred_check_branch
        %133 = sbr.rel (%p131) target = $region20
      $region19: #{encoder_forward.3} parent=5 // pred_region
        // Predicated region
        $region21: #{encoder_forward.3} parent=19 // pred_check
          %p134 = pneg %p49
        $region22: #{encoder_forward.3} parent=19 // pred_check_branch
          %136 = sbr.rel (%p134) target = $region24
        $region23: #{encoder_forward.3} parent=19 // pred_region
          %s137 = sand.u32 %s39, 1
          %s138 = scalar_lea.sflag [#allocation3], %s137
          %s139 = sand.u32 %s39, 1
          %s140 = smul.addr %s139, 8
          %s141 = scalar_lea.vmem [#allocation2], %s140
          %s142 = smul.u32 2, %s23
          %s144 = ssub.s32 128, 128
          %145 = vsyncadd %s138, %s144
          %s146 = smul.addr %s22, 2
          %s147 = sadd.s32 %s142, %s146
          %s148 = smul.addr %s147, 64
          %s149 = scalar_lea.hbm %s0, %s148
          %s151 = sshll.u32 %s141, 4
          %s152 = int_to_ptr.vmem [resolvable:$true] %s151
          %154 = dma.hbm_to_vmem [thread:$0]  %s149, 128, %s152, %s138
        $region24: #{encoder_forward.3} parent=19 // pred_fallthru
          _
      $region20: #{encoder_forward.3} parent=5 // pred_fallthru
        _
      %p155 = scmp.le.s32.totalorder 1, %s15
      %p156 = scmp.lt.s32.totalorder %s15, 3
      %p157 = pnand %p155, %p156
      %p158 = pneg %p157
      // Predicated region
      $region25: #{encoder_forward.3} parent=5 // pred_check
        _
      $region26: #{encoder_forward.3} parent=5 // pred_check_branch
        %160 = sbr.rel (%p157) target = $region28
      $region27: #{encoder_forward.3} parent=5 // pred_region
        %s161 = ssub.s32 %s15, 1
        %s162 = sand.u32 %s42, 1
        %s163 = scalar_lea.sflag [#allocation3], %s162
        %s164 = sand.u32 %s42, 1
        %s165 = smul.addr %s164, 8
        %s166 = scalar_lea.vmem [#allocation2], %s165
        // Predicated region
        $region29: #{encoder_forward.3} parent=27 // pred_check
          %p167 = pneg %p55
        $region30: #{encoder_forward.3} parent=27 // pred_check_branch
          %169 = sbr.rel (%p167) target = $region32
        $region31: #{encoder_forward.3} parent=27 // pred_region
          %170 = dma.done %s163, 128
        $region32: #{encoder_forward.3} parent=27 // pred_fallthru
          _
        // Predicated region
        $region33: #{encoder_forward.3} parent=27 // pred_check
          %p171 = pneg %p76
        $region34: #{encoder_forward.3} parent=27 // pred_check_branch
          %173 = sbr.rel (%p171) target = $region36
        $region35: #{encoder_forward.3} parent=27 // pred_region
          %174 = dma.done [#allocation6], 128
        $region36: #{encoder_forward.3} parent=27 // pred_fallthru
          _
        %s175 = sand.u32 %s42, 1
        %s176 = scalar_lea.sflag [#allocation3], %s175
        %s177 = sand.u32 %s42, 1
        %s178 = smul.addr %s177, 8
        %s179 = scalar_lea.vmem [#allocation2], %s178
        %p180 = pneg %p55
        %p181 = pneg %p52
        %p182 = pneg %p76
        %p183 = pneg %p73
        %p184 = pneg %p104
        %p185 = pneg %p101
        %s186 = sand.u32 %s91, 1
        %s187 = scalar_lea.sflag [#allocation4], %s186
        %s188 = sand.u32 %s91, 1
        %s189 = smul.addr %s188, 16
        %s190 = scalar_lea.vmem [#allocation7], %s189
        %s191 = smul.u32 2, %s25
        %s192 = smul.u32 2, %s25
        %v193 = vld [vmem:[#allocation5] sm:$0xff]
        %v194 = vld [vmem:[%s166] sm:$0xff]
        %v195 = vunpack.c.l.bf16 %v194
        %v196 = vunpack.c.h.bf16 %v194
        %198 = vset.pattern.permute.xlu0 0
        %199 = vperm.xlu0 %198, %v193
        %v200 = vpop.permute.xlu0 %199
        %v202 = vmul.f32 %v195, %v200
        %v203 = vmul.f32 %v196, %v200
        %204 = vset.pattern.permute.xlu0 1
        %205 = vperm.xlu0 %204, %v193
        %v206 = vpop.permute.xlu0 %205
        %v208 = vadd.f32 %v202, %v206
        %v209 = vadd.f32 %v203, %v206
        %v210 = vmax.f32 %v208, 0.0
        %v211 = vmax.f32 %v209, 0.0
        %212 = vst [vmem:[%s190] sm:$0xff] %v210
        %213 = vst [vmem:[%s190 + $0x8] sm:$0xff] %v211
        %s214 = sand.u32 %s91, 1
        %s215 = scalar_lea.sflag [#allocation4], %s214
        %s216 = sand.u32 %s91, 1
        %s217 = smul.addr %s216, 16
        %s218 = scalar_lea.vmem [#allocation7], %s217
        // Predicated region
        $region37: #{encoder_forward.3} parent=27 // pred_check
          %p219 = pneg %p101
        $region38: #{encoder_forward.3} parent=27 // pred_check_branch
          %221 = sbr.rel (%p219) target = $region40
        $region39: #{encoder_forward.3} parent=27 // pred_region
          %s222 = smul.u32 2, %s25
          %s224 = ssub.s32 256, 256
          %225 = vsyncadd %s215, %s224
          %s226 = smul.addr %s24, 2
          %s227 = sadd.s32 %s222, %s226
          %s228 = smul.addr %s227, 128
          %s229 = scalar_lea.hbm %s2, %s228
          %s231 = sshll.u32 %s218, 4
          %s232 = int_to_ptr.vmem [resolvable:$true] %s231
          %234 = dma.vmem_to_hbm [thread:$0]  %s232, 256, %s229, %s215
        $region40: #{encoder_forward.3} parent=27 // pred_fallthru
          _
      $region28: #{encoder_forward.3} parent=5 // pred_fallthru
        _
      %p235 = scmp.le.s32.totalorder 2, %s15
      // Predicated region
      $region41: #{encoder_forward.3} parent=5 // pred_check
        %p236 = pneg %p235
      $region42: #{encoder_forward.3} parent=5 // pred_check_branch
        %238 = sbr.rel (%p236) target = $region44
      $region43: #{encoder_forward.3} parent=5 // pred_region
        %s239 = ssub.s32 %s15, 2
        // Predicated region
        $region45: #{encoder_forward.3} parent=43 // pred_check
          %p240 = pneg %p107
        $region46: #{encoder_forward.3} parent=43 // pred_check_branch
          %242 = sbr.rel (%p240) target = $region48
        $region47: #{encoder_forward.3} parent=43 // pred_region
          %s243 = sand.u32 %s92, 1
          %s244 = scalar_lea.sflag [#allocation4], %s243
          %s245 = sand.u32 %s92, 1
          %s246 = smul.addr %s245, 16
          %s247 = scalar_lea.vmem [#allocation7], %s246
          %248 = dma.done %s244, 256
        $region48: #{encoder_forward.3} parent=43 // pred_fallthru
          _
      $region44: #{encoder_forward.3} parent=5 // pred_fallthru
        _
    $region6: #{encoder_forward.3} parent=1 // loop_footer
      %s19 = sadd.s32 1, %s15
    $region7: #{encoder_forward.3} parent=1 // loop_footer_branch
      %14 = sbr.rel target = $region3
    $region8: #{encoder_forward.3} parent=1 // loop_exit
      _
    %249 = vsyncpa [#allocation3], 1
    %s250 = scalar_lea.sflag [#allocation3], 1
    %251 = vsyncpa %s250, 1
    %252 = vsyncpa [#allocation6], 1
    %253 = vsyncpa [#allocation4], 1
    %s254 = scalar_lea.sflag [#allocation4], 1
    %255 = vsyncpa %s254, 1

// kernel: encoder_forward.2
$region0: #{encoder_forward.2}
  #allocation0 [shape = 'u32[]', space=smem, size = 0x4, offset = 0x4, fixed_abs, tag = 'smem constant byte address 0x4 - core index']
  #allocation1 [shape = 'u32[144,128]{1,0:T(1,128)}', space=vmem, size = 0x12000, scoped, tag = 'internal scratch']
  %s0 = inlined_call_operand.hbm [shape: bf16[2,36,256], index: 0, kind: input, shape index: {}]
  %s1 = inlined_call_operand.hbm [shape: bf16[8,36], index: 1, kind: input, shape index: {}]
  %s2 = inlined_call_operand.hbm [shape: bf16[2,8,256], index: 2, kind: output, shape index: {0}]
  %s3 = inlined_call_operand.hbm [shape: f32[2,8,2], index: 3, kind: output, shape index: {1}]
  %4 = xla_tuple %s2, %s3
  %s5 = sld [smem:[#allocation0]]
  $region61: #{encoder_forward.2} parent=0
    _
  %s7 = ssub.s32 1, %s5
  %s8 = scalar_select 0, %s7, %s5
  $region1: #{encoder_forward.2} parent=0
    #allocation2 [shape = 'u8[40960]{0}', space=vmem, size = 0xa000, scoped, tag = 'input window, operand 0']
    #allocation3 [shape = 's32[2]{0}', space=sflag, size = 0x8, scoped, tag = 'scoped memory for encoder_forward.2']
    #allocation4 [shape = 's32[2]{0}', space=sflag, size = 0x8, scoped, tag = 'scoped memory for encoder_forward.2']
    #allocation5 [shape = 'u8[2048]{0}', space=vmem, size = 0x800, scoped, tag = 'input window, operand 1, single buffered']
    #allocation6 [shape = 's32[1]{0}', space=sflag, size = 0x4, scoped, tag = 'scoped memory for encoder_forward.2']
    #allocation7 [shape = 'u8[8192]{0}', space=vmem, size = 0x2000, scoped, tag = 'output window, operand 0']
    #allocation8 [shape = 'u8[8192]{0}', space=vmem, size = 0x2000, scoped, tag = 'output window, operand 1']
    #allocation9 [shape = 's32[2]{0}', space=sflag, size = 0x8, scoped, tag = 'scoped memory for encoder_forward.2']
    %9 = vsyncpa [#allocation3], 0
    %s10 = scalar_lea.sflag [#allocation3], 1
    %11 = vsyncpa %s10, 0
    %12 = vsyncpa [#allocation6], 0
    %13 = vsyncpa [#allocation4], 0
    %s14 = scalar_lea.sflag [#allocation4], 1
    %15 = vsyncpa %s14, 0
    %16 = vsyncpa [#allocation9], 0
    %s17 = scalar_lea.sflag [#allocation9], 1
    %18 = vsyncpa %s17, 0
    loop: start=0, step=1, limit=4
    $region2: #{encoder_forward.2} parent=1 // loop_pre_header
      _
    $region3: #{encoder_forward.2} parent=1 // loop_header
      %s20 = sphi 0, %s24
      %p21 = scmp.ge.s32.totalorder %s20, 4
      %s27 = sphi 0, %s39
      %s28 = sphi 0, %s35
      %s29 = sphi 0, %s27
      %s30 = sphi 0, %s28
      %s31 = sphi 0, %s29
      %s32 = sphi 0, %s30
      %s44 = sphi 0, %s46
      %s47 = sphi 0, %s44
      %s48 = sphi 0, %s47
      %s64 = sphi 0, %s48
      %s68 = sphi 0, %s68
      %s70 = sphi 0, %s68
      %s71 = sphi 0, %s70
      %s85 = sphi 0, %s71
      %s93 = sphi 0, %s95
      %s96 = sphi 0, %s93
      %s97 = sphi 0, %s96
      %s113 = sphi 0, %s97
      %s119 = sphi 0, %s121
      %s122 = sphi 0, %s119
      %s123 = sphi 0, %s122
      %s139 = sphi 0, %s123
    $region4: #{encoder_forward.2} parent=1 // loop_header_branch
      %23 = sbr.rel (%p21) target = $region8
    $region5: #{encoder_forward.2} parent=1 // loop_body
      %s25 = ssub.s32 %s20, 1
      %s26 = ssub.s32 %s20, 2
      %s33 = sadd.s32 1, %s28
      %p34 = scmp.ge.s32.totalorder %s33, 1
      %s35 = scalar_select %p34, 0, %s33
      %s36 = sadd.s32 1, %s27
      %s37 = scalar_select %p34, %s36, %s27
      %p38 = scmp.ge.s32.totalorder %s37, 2
      %s39 = scalar_select %p38, 0, %s37
      %s40 = ssub.s32 %s27, %s39
      %s41 = ssub.s32 %s28, %s35
      %s42 = sor.u32 %s40, %s41
      %p43 = scmp.eq.s32.totalorder %s42, 0
      %s45 = sadd.s32 %s44, 1
      %s46 = scalar_select %p43, %s44, %s45
      %p49 = pneg %p43
      %p50 = scmp.eq.s32.totalorder %s20, 1
      %p51 = por %p49, %p50
      %p52 = scmp.ne.s32.totalorder %s44, %s47
      %p53 = scmp.eq.s32.totalorder %s20, 0
      %p54 = por %p52, %p53
      %p55 = scmp.ne.s32.totalorder %s44, %s47
      %p56 = scmp.eq.s32.totalorder %s25, 1
      %p57 = por %p55, %p56
      %p58 = scmp.ne.s32.totalorder %s47, %s48
      %p59 = scmp.eq.s32.totalorder %s25, 0
      %p60 = por %p58, %p59
      %p61 = scmp.ne.s32.totalorder %s47, %s48
      %p62 = scmp.eq.s32.totalorder %s26, 1
      %p63 = por %p61, %p62
      %p65 = scmp.ne.s32.totalorder %s48, %s64
      %p66 = scmp.eq.s32.totalorder %s26, 0
      %p67 = por %p65, %p66
      %s69 = sadd.s32 %s68, 1
      %p72 = scmp.eq.s32.totalorder %s20, 1
      %p73 = scmp.ne.s32.totalorder %s68, %s70
      %p74 = scmp.eq.s32.totalorder %s20, 0
      %p75 = por %p73, %p74
      %p76 = scmp.ne.s32.totalorder %s68, %s70
      %p77 = scmp.eq.s32.totalorder %s25, 1
      %p78 = por %p76, %p77
      %p79 = scmp.ne.s32.totalorder %s70, %s71
      %p80 = scmp.eq.s32.totalorder %s25, 0
      %p81 = por %p79, %p80
      %p82 = scmp.ne.s32.totalorder %s70, %s71
      %p83 = scmp.eq.s32.totalorder %s26, 1
      %p84 = por %p82, %p83
      %p86 = scmp.ne.s32.totalorder %s71, %s85
      %p87 = scmp.eq.s32.totalorder %s26, 0
      %p88 = por %p86, %p87
      %s89 = ssub.s32 %s27, %s39
      %s90 = ssub.s32 %s28, %s35
      %s91 = sor.u32 %s89, %s90
      %p92 = scmp.eq.s32.totalorder %s91, 0
      %s94 = sadd.s32 %s93, 1
      %s95 = scalar_select %p92, %s93, %s94
      %p98 = pneg %p92
      %p99 = scmp.eq.s32.totalorder %s20, 1
      %p100 = por %p98, %p99
      %p101 = scmp.ne.s32.totalorder %s93, %s96
      %p102 = scmp.eq.s32.totalorder %s20, 0
      %p103 = por %p101, %p102
      %p104 = scmp.ne.s32.totalorder %s93, %s96
      %p105 = scmp.eq.s32.totalorder %s25, 1
      %p106 = por %p104, %p105
      %p107 = scmp.ne.s32.totalorder %s96, %s97
      %p108 = scmp.eq.s32.totalorder %s25, 0
      %p109 = por %p107, %p108
      %p110 = scmp.ne.s32.totalorder %s96, %s97
      %p111 = scmp.eq.s32.totalorder %s26, 1
      %p112 = por %p110, %p111
      %p114 = scmp.ne.s32.totalorder %s97, %s113
      %p115 = scmp.eq.s32.totalorder %s26, 0
      %p116 = por %p114, %p115
      %s117 = ssub.s32 %s27, %s39
      %p118 = scmp.eq.s32.totalorder %s117, 0
      %s120 = sadd.s32 %s119, 1
      %s121 = scalar_select %p118, %s119, %s120
      %p124 = pneg %p118
      %p125 = scmp.eq.s32.totalorder %s20, 1
      %p126 = por %p124, %p125
      %p127 = scmp.ne.s32.totalorder %s119, %s122
      %p128 = scmp.eq.s32.totalorder %s20, 0
      %p129 = por %p127, %p128
      %p130 = scmp.ne.s32.totalorder %s119, %s122
      %p131 = scmp.eq.s32.totalorder %s25, 1
      %p132 = por %p130, %p131
      %p133 = scmp.ne.s32.totalorder %s122, %s123
      %p134 = scmp.eq.s32.totalorder %s25, 0
      %p135 = por %p133, %p134
      %p136 = scmp.ne.s32.totalorder %s122, %s123
      %p137 = scmp.eq.s32.totalorder %s26, 1
      %p138 = por %p136, %p137
      %p140 = scmp.ne.s32.totalorder %s123, %s139
      %p141 = scmp.eq.s32.totalorder %s26, 0
      %p142 = por %p140, %p141
      %p143 = scmp.le.s32.totalorder 1, %s20
      %p144 = scmp.lt.s32.totalorder %s20, 3
      %p145 = pnand %p143, %p144
      %p146 = pneg %p145
      // Predicated region
      $region9: #{encoder_forward.2} parent=5 // pred_check
        _
      $region10: #{encoder_forward.2} parent=5 // pred_check_branch
        %148 = sbr.rel (%p145) target = $region12
      $region11: #{encoder_forward.2} parent=5 // pred_region
        %s149 = ssub.s32 %s20, 1
        // Predicated region
        $region13: #{encoder_forward.2} parent=11 // pred_check
          %p150 = pneg %p81
        $region14: #{encoder_forward.2} parent=11 // pred_check_branch
          %152 = sbr.rel (%p150) target = $region16
        $region15: #{encoder_forward.2} parent=11 // pred_region
          %s154 = ssub.s32 64, 64
          %155 = vsyncadd [#allocation6], %s154
          %s157 = sshll.u32 [#allocation5], 4
          %s158 = int_to_ptr.vmem [resolvable:$true] %s157
          %160 = dma.hbm_to_vmem [thread:$0]  %s1, 64, %s158, [#allocation6]
        $region16: #{encoder_forward.2} parent=11 // pred_fallthru
          _
      $region12: #{encoder_forward.2} parent=5 // pred_fallthru
        _
      %p161 = scmp.lt.s32.totalorder %s20, 2
      // Predicated region
      $region17: #{encoder_forward.2} parent=5 // pred_check
        %p162 = pneg %p161
      $region18: #{encoder_forward.2} parent=5 // pred_check_branch
        %164 = sbr.rel (%p162) target = $region20
      $region19: #{encoder_forward.2} parent=5 // pred_region
        // Predicated region
        $region21: #{encoder_forward.2} parent=19 // pred_check
          %p165 = pneg %p54
        $region22: #{encoder_forward.2} parent=19 // pred_check_branch
          %167 = sbr.rel (%p165) target = $region24
        $region23: #{encoder_forward.2} parent=19 // pred_region
          %s168 = sand.u32 %s44, 1
          %s169 = scalar_lea.sflag [#allocation3], %s168
          %s170 = sand.u32 %s44, 1
          %s171 = smul.addr %s170, 40
          %s172 = scalar_lea.vmem [#allocation2], %s171
          %s173 = smul.u32 2, %s28
          %s175 = ssub.s32 640, 640
          %176 = vsyncadd %s169, %s175
          %s177 = smul.addr %s27, 10
          %s178 = sadd.s32 %s173, %s177
          %s179 = smul.addr %s178, 64
          %s180 = scalar_lea.hbm %s0, %s179
          %s181 = sshll.u32 %s172, 4
          %s182 = int_to_ptr.vmem [resolvable:$true] %s181
          %187 = dma.hbm_to_vmem [thread:$0]  %s180, 640, %s182, %s169, 128, 128, 8
        $region24: #{encoder_forward.2} parent=19 // pred_fallthru
          _
      $region20: #{encoder_forward.2} parent=5 // pred_fallthru
        _
      %p188 = scmp.le.s32.totalorder 1, %s20
      %p189 = scmp.lt.s32.totalorder %s20, 3
      %p190 = pnand %p188, %p189
      %p191 = pneg %p190
      // Predicated region
      $region25: #{encoder_forward.2} parent=5 // pred_check
        _
      $region26: #{encoder_forward.2} parent=5 // pred_check_branch
        %193 = sbr.rel (%p190) target = $region28
      $region27: #{encoder_forward.2} parent=5 // pred_region
        %s194 = ssub.s32 %s20, 1
        %s195 = sand.u32 %s47, 1
        %s196 = scalar_lea.sflag [#allocation3], %s195
        %s197 = sand.u32 %s47, 1
        %s198 = smul.addr %s197, 40
        %s199 = scalar_lea.vmem [#allocation2], %s198
        // Predicated region
        $region29: #{encoder_forward.2} parent=27 // pred_check
          %p200 = pneg %p60
        $region30: #{encoder_forward.2} parent=27 // pred_check_branch
          %202 = sbr.rel (%p200) target = $region32
        $region31: #{encoder_forward.2} parent=27 // pred_region
          %203 = dma.done %s196, 640
        $region32: #{encoder_forward.2} parent=27 // pred_fallthru
          _
        // Predicated region
        $region33: #{encoder_forward.2} parent=27 // pred_check
          %p204 = pneg %p81
        $region34: #{encoder_forward.2} parent=27 // pred_check_branch
          %206 = sbr.rel (%p204) target = $region36
        $region35: #{encoder_forward.2} parent=27 // pred_region
          %207 = dma.done [#allocation6], 64
        $region36: #{encoder_forward.2} parent=27 // pred_fallthru
          _
        %s208 = sand.u32 %s47, 1
        %s209 = scalar_lea.sflag [#allocation3], %s208
        %s210 = sand.u32 %s47, 1
        %s211 = smul.addr %s210, 40
        %s212 = scalar_lea.vmem [#allocation2], %s211
        %p213 = pneg %p60
        %p214 = pneg %p57
        %p215 = pneg %p81
        %p216 = pneg %p78
        %p217 = pneg %p109
        %p218 = pneg %p106
        %s219 = sand.u32 %s96, 1
        %s220 = scalar_lea.sflag [#allocation4], %s219
        %s221 = sand.u32 %s96, 1
        %s222 = smul.addr %s221, 8
        %s223 = scalar_lea.vmem [#allocation7], %s222
        %p224 = pneg %p135
        %p225 = pneg %p132
        %s226 = sand.u32 %s122, 1
        %s227 = scalar_lea.sflag [#allocation9], %s226
        %s228 = sand.u32 %s122, 1
        %s229 = smul.addr %s228, 8
        %s230 = scalar_lea.vmem [#allocation8], %s229
        %s231 = smul.u32 2, %s30
        %s232 = smul.u32 2, %s30
        %p234 = scmp.eq.s32.totalorder %s30, 0
        // Predicated region
        $region37: #{encoder_forward.2} parent=27 // pred_check
          %p235 = pneg %p234
        $region38: #{encoder_forward.2} parent=27 // pred_check_branch
          %237 = sbr.rel (%p235) target = $region40
        $region39: #{encoder_forward.2} parent=27 // pred_region
          %vm238 = vcmask 15360
          %239 = vst.msk [vmem:[%s230] sm:$0xff] %vm238, 0.0
        $region40: #{encoder_forward.2} parent=27 // pred_fallthru
          _
        %v240 = vld [vmem:[#allocation5] sm:$0xf]
        %v241 = vld [vmem:[%s199] sm:$0xff]
        %v242 = vld [vmem:[%s199 + $0x8] sm:$0xff]
        %v243 = vld [vmem:[%s199 + $0x10] sm:$0xff]
        %v244 = vld [vmem:[%s199 + $0x18] sm:$0xff]
        %v245 = vld [vmem:[%s199 + $0x20] sm:$0x33]
        %v251 = vunpack.c.l.b16 %v241
        %v252 = vunpack.c.h.b16 %v241
        %v253 = vunpack.c.l.b16 %v242
        %v254 = vunpack.c.h.b16 %v242
        %v255 = vunpack.c.l.b16 %v243
        %v256 = vunpack.c.h.b16 %v243
        %v257 = vunpack.c.l.b16 %v244
        %v258 = vunpack.c.h.b16 %v244
        %v259 = vunpack.c.l.b16 %v245
        %v260 = vunpack.c.h.b16 %v245
        %v261 = vpack.c.b16 %v253, %v251
        %v262 = vpack.c.b16 %v254, %v252
        %v263 = vpack.c.b16 %v257, %v255
        %v264 = vpack.c.b16 %v258, %v256
        %v265 = vpack.c.b16 %v259, %v259
        %v266 = vpack.c.b16 %v260, %v260
        %vm271 = vcmask 293888
        %v273 = vsel %vm271, %v240, 0
        %vm275 = vcmask 1041408
        %v277 = vsel %vm275, %v265, 0
        %v280 = vsel %vm275, %v266, 0
        %282 = vmatprep.subr.bf16.mxu0 %v262
        %283 = vmatpush1.bf16.msra.mxu0 %v261
        %284 = vmatprep.subr.bf16.mxu0 %v264
        %285 = vmatpush1.bf16.msra.mxu0 %v263
        %286 = vmatprep.subr.bf16.mxu0 %v280
        %287 = vmatpush1.bf16.msra.mxu0 %v277
        %288 = vmatprep.subr.bf16.mxu0 0
        %289 = vmatpush1.bf16.msra.mxu0 0
        %290 = vmatprep.subr.bf16.mxu0 0
        %291 = vmatpush1.bf16.msra.mxu0 0
        %292 = vmatprep.subr.bf16.mxu0 0
        %293 = vmatpush1.bf16.msra.mxu0 0
        %294 = vmatprep.subr.bf16.mxu0 0
        %295 = vmatpush1.bf16.msra.mxu0 0
        %296 = vmatprep.subr.bf16.mxu0 0
        %297 = vmatpush1.bf16.msra.mxu0 0
        %298 = vmatprep.subr.bf16.mxu0 0
        %299 = vmatpush1.bf16.msra.mxu0 0
        %300 = vmatprep.subr.bf16.mxu0 0
        %301 = vmatpush1.bf16.msra.mxu0 0
        %302 = vmatprep.subr.bf16.mxu0 0
        %303 = vmatpush1.bf16.msra.mxu0 0
        %304 = vmatprep.subr.bf16.mxu0 0
        %305 = vmatpush1.bf16.msra.mxu0 0
        %306 = vmatprep.subr.bf16.mxu0 0
        %307 = vmatpush1.bf16.msra.mxu0 0
        %308 = vmatprep.subr.bf16.mxu0 0
        %309 = vmatpush1.bf16.msra.mxu0 0
        %310 = vmatprep.subr.bf16.mxu0 0
        %311 = vmatpush1.bf16.msra.mxu0 0
        %312 = vmatprep.subr.bf16.mxu0 0
        %313 = vmatpush1.bf16.msra.mxu0 0
        %314 = vmatprep.mubr.bf16.mxu0 0
        %315 = vmatmul.mubr.bf16.gmra.mrb[0].mxu0 %v273
        %v316 = vpop.f32.mrb[0].mxu0
        %v317 = vadd.f32 0.0, %v316
        %v318 = vpop.f32.mrb[0].mxu0
        %v319 = vadd.f32 0.0, %v318
        %v320 = vpop.f32.mrb[0].mxu0
        %v321 = vpop.f32.mrb[0].mxu0
        %322 = vdwg.mxu0
        %v323 = vpack.c.bf16 %v317, %v317
        %v324 = vpack.c.bf16 %v319, %v319
        %v327 = vunpack.c.l.b16 %v323
        %v328 = vunpack.c.l.b16 %v324
        %v329 = vpack.c.b16 %v328, %v327
        %331 = vst [vmem:[%s223] sm:$0xff] %v329
        %v332 = vld [vmem:[%s230] sm:$0xff]
        %v333 = vadd.f32 %v317, %v319
        %334 = vadd.xlane.f32.xlu0 %v333
        %v335 = vpop.xlane.xlu0 %334
        %v336 = vadd.f32 %v332, %v335
        %vm337 = vcmask 7168
        %338 = vst.msk [vmem:[%s230] sm:$0xff] %vm337, %v336
        %v339 = vld [vmem:[%s230] sm:$0xff]
        %v340 = vmul.f32 %v317, %v317
        %v341 = vmul.f32 %v319, %v319
        %v342 = vadd.f32 %v340, %v341
        %343 = vadd.xlane.f32.xlu0 %v342
        %v344 = vpop.xlane.xlu0 %343
        %v345 = vadd.f32 %v339, %v344
        %vm346 = vcmask 15368
        %347 = vst.msk [vmem:[%s230] sm:$0xff] %vm346, %v345
        %s348 = sand.u32 %s96, 1
        %s349 = scalar_lea.sflag [#allocation4], %s348
        %s350 = sand.u32 %s96, 1
        %s351 = smul.addr %s350, 8
        %s352 = scalar_lea.vmem [#allocation7], %s351
        %s353 = sand.u32 %s122, 1
        %s354 = scalar_lea.sflag [#allocation9], %s353
        %s355 = sand.u32 %s122, 1
        %s356 = smul.addr %s355, 8
        %s357 = scalar_lea.vmem [#allocation8], %s356
        // Predicated region
        $region41: #{encoder_forward.2} parent=27 // pred_check
          %p358 = pneg %p106
        $region42: #{encoder_forward.2} parent=27 // pred_check_branch
          %360 = sbr.rel (%p358) target = $region44
        $region43: #{encoder_forward.2} parent=27 // pred_region
          %s361 = smul.u32 2, %s30
          %s363 = ssub.s32 128, 128
          %364 = vsyncadd %s349, %s363
          %s365 = smul.addr %s29, 2
          %s366 = sadd.s32 %s361, %s365
          %s367 = smul.addr %s366, 64
          %s368 = scalar_lea.hbm %s2, %s367
          %s370 = sshll.u32 %s352, 4
          %s371 = int_to_ptr.vmem [resolvable:$true] %s370
          %373 = dma.vmem_to_hbm [thread:$0]  %s371, 128, %s368, %s349
        $region44: #{encoder_forward.2} parent=27 // pred_fallthru
          _
        // Predicated region
        $region45: #{encoder_forward.2} parent=27 // pred_check
          %p374 = pneg %p132
        $region46: #{encoder_forward.2} parent=27 // pred_check_branch
          %376 = sbr.rel (%p374) target = $region48
        $region47: #{encoder_forward.2} parent=27 // pred_region
          %s378 = ssub.s32 128, 128
          %379 = vsyncadd %s354, %s378
          %s380 = smul.addr %s29, 128
          %s381 = scalar_lea.hbm %s3, %s380
          %s383 = sshll.u32 %s357, 4
          %s384 = int_to_ptr.vmem [resolvable:$true] %s383
          %386 = dma.vmem_to_hbm [thread:$0]  %s384, 128, %s381, %s354
        $region48: #{encoder_forward.2} parent=27 // pred_fallthru
          _
      $region28: #{encoder_forward.2} parent=5 // pred_fallthru
        _
      %p387 = scmp.le.s32.totalorder 2, %s20
      // Predicated region
      $region49: #{encoder_forward.2} parent=5 // pred_check
        %p388 = pneg %p387
      $region50: #{encoder_forward.2} parent=5 // pred_check_branch
        %390 = sbr.rel (%p388) target = $region52
      $region51: #{encoder_forward.2} parent=5 // pred_region
        %s391 = ssub.s32 %s20, 2
        // Predicated region
        $region53: #{encoder_forward.2} parent=51 // pred_check
          %p392 = pneg %p112
        $region54: #{encoder_forward.2} parent=51 // pred_check_branch
          %394 = sbr.rel (%p392) target = $region56
        $region55: #{encoder_forward.2} parent=51 // pred_region
          %s395 = sand.u32 %s97, 1
          %s396 = scalar_lea.sflag [#allocation4], %s395
          %s397 = sand.u32 %s97, 1
          %s398 = smul.addr %s397, 8
          %s399 = scalar_lea.vmem [#allocation7], %s398
          %400 = dma.done %s396, 128
        $region56: #{encoder_forward.2} parent=51 // pred_fallthru
          _
        // Predicated region
        $region57: #{encoder_forward.2} parent=51 // pred_check
          %p401 = pneg %p138
        $region58: #{encoder_forward.2} parent=51 // pred_check_branch
          %403 = sbr.rel (%p401) target = $region60
        $region59: #{encoder_forward.2} parent=51 // pred_region
          %s404 = sand.u32 %s123, 1
          %s405 = scalar_lea.sflag [#allocation9], %s404
          %s406 = sand.u32 %s123, 1
          %s407 = smul.addr %s406, 8
          %s408 = scalar_lea.vmem [#allocation8], %s407
          %409 = dma.done %s405, 128
        $region60: #{encoder_forward.2} parent=51 // pred_fallthru
          _
      $region52: #{encoder_forward.2} parent=5 // pred_fallthru
        _
    $region6: #{encoder_forward.2} parent=1 // loop_footer
      %s24 = sadd.s32 1, %s20
    $region7: #{encoder_forward.2} parent=1 // loop_footer_branch
      %19 = sbr.rel target = $region3
    $region8: #{encoder_forward.2} parent=1 // loop_exit
      _
    %410 = vsyncpa [#allocation3], 1
    %s411 = scalar_lea.sflag [#allocation3], 1
    %412 = vsyncpa %s411, 1
    %413 = vsyncpa [#allocation6], 1
    %414 = vsyncpa [#allocation4], 1
    %s415 = scalar_lea.sflag [#allocation4], 1
    %416 = vsyncpa %s415, 1
    %417 = vsyncpa [#allocation9], 1
    %s418 = scalar_lea.sflag [#allocation9], 1
    %419 = vsyncpa %s418, 1

</llo_original>
